<compile_context>
chip_gen: v7x
topology: tpu7x:2x2x1
jax: 0.10.0
libtpu: 0.0.40
codegen_flags: <defaults>
</compile_context>

<pallas_src>
import functools

import jax
import jax.numpy as jnp
from jax.experimental import pallas as pl
from jax.experimental.pallas import tpu as pltpu

HIDDEN = 768       # BERT hidden size (fc1: 768 -> 768)
NUM_CLASSES = 2    # fc2: 768 -> 2
N_PAD = 128        # lane-padded output width for the folded fc layer
TM_CAP = 2048      # keeps double-buffered x (f32) ~12 MiB worst case: fits v5e's
                   # 16 MiB scoped VMEM and v7x's 32 MiB default; 1024 is the sweet spot.


def scorer_kernel(x_ref, w_ref, b_ref, o_ref):
    """o = x @ W_eff + b_eff  (single lane-dense MXU matmul, f32 accumulation).

    x arrives in its HBM dtype (f32) and is cast to the folded-weight dtype
    (bf16 by default) right before the MXU, so x is only read once from HBM.
    """
    x = x_ref[...].astype(w_ref.dtype)
    logit = jnp.dot(x, w_ref[...], preferred_element_type=jnp.float32) + b_ref[...]
    o_ref[...] = logit.astype(o_ref.dtype)


def _round_up(x, m):
    return (x + m - 1) // m * m


def fold_scorer_params(w1, b1, w2, b2, *, use_bf16=True):
    """Fold the two stacked Linear layers once, at parameter-load time.

    Exact fold: there is no activation between fc1 and fc2, so
        logit = (x @ W1 + b1) @ W2 + b2 = x @ (W1 @ W2) + (b1 @ W2 + b2).

    Weight layout is (in_features, out_features), i.e. TRANSPOSED relative to
    torch nn.Linear.weight:  w1 = fc1.weight.T (768, 768), w2 = fc2.weight.T
    (768, 2).  The non-square fc2 shape is asserted to catch layout mistakes.

    Returns (w_pad, b_pad):
      w_pad: (768, 128)  folded weight, zero-padded on the lane axis,
             bf16 if use_bf16 else f32.
      b_pad: (1, 128)    folded bias, f32 (added to the f32 MXU accumulator).
    """
    assert w1.shape == (HIDDEN, HIDDEN) and b1.shape == (HIDDEN,)
    assert w2.shape == (HIDDEN, NUM_CLASSES) and b2.shape == (NUM_CLASSES,), (
        "w2 must be (768, 2) = fc2.weight.T — weights use (in, out) layout")
    w_eff = w1 @ w2                # (768, 2)
    b_eff = b1 @ w2 + b2           # (2,)
    w_pad = jnp.pad(w_eff, ((0, 0), (0, N_PAD - NUM_CLASSES)))
    b_pad = jnp.pad(b_eff, (0, N_PAD - NUM_CLASSES)).reshape(1, N_PAD)
    if use_bf16:
        w_pad = w_pad.astype(jnp.bfloat16)
    return w_pad, b_pad.astype(jnp.float32)


@functools.partial(jax.jit, static_argnames=("tm",))
def scorer_forward(embed, w_pad, b_pad, *, tm=1024):
    """embed: (B, 768) f32 -> logits (B, 2) f32, using pre-folded params."""
    B, H = embed.shape
    assert H == HIDDEN
    assert w_pad.shape == (HIDDEN, N_PAD) and b_pad.shape == (1, N_PAD)

    use_bf16 = w_pad.dtype == jnp.bfloat16
    out_dtype = jnp.bfloat16 if use_bf16 else jnp.float32
    # bf16 output tiles want >= (16, 128); f32 is fine at (8, 128).
    sub = 16 if use_bf16 else 8

    # Tile selection: big tiles for HBM-roofline efficiency, capped for VMEM,
    # and >= 2 grid steps whenever possible so v7x megacore uses both TCs.
    tm = min(tm, TM_CAP)
    tm_eff = min(tm, _round_up(B, sub))
    if tm_eff >= 2 * sub and pl.cdiv(B, tm_eff) == 1:
        tm_eff = _round_up(pl.cdiv(B, 2), sub)
    grid = (pl.cdiv(B, tm_eff),)

    x_itemsize = jnp.dtype(embed.dtype).itemsize
    w_itemsize = jnp.dtype(w_pad.dtype).itemsize
    o_itemsize = jnp.dtype(out_dtype).itemsize
    cost = pl.CostEstimate(
        flops=2 * B * HIDDEN * N_PAD,
        transcendentals=0,
        bytes_accessed=(B * HIDDEN * x_itemsize       # x (read once, f32)
                        + HIDDEN * N_PAD * w_itemsize  # folded weight (resident)
                        + N_PAD * 4                    # folded bias
                        + B * N_PAD * o_itemsize),     # padded output writeback
    )

    out_padded = pl.pallas_call(
        scorer_kernel,
        out_shape=jax.ShapeDtypeStruct((B, N_PAD), out_dtype),
        grid_spec=pltpu.PrefetchScalarGridSpec(
            num_scalar_prefetch=0,
            grid=grid,
            in_specs=[
                pl.BlockSpec((tm_eff, HIDDEN), lambda i: (i, 0)),  # x tile (f32)
                pl.BlockSpec((HIDDEN, N_PAD), lambda i: (0, 0)),   # W_eff (const)
                pl.BlockSpec((1, N_PAD), lambda i: (0, 0)),        # b_eff (const)
            ],
            out_specs=pl.BlockSpec((tm_eff, N_PAD), lambda i: (i, 0)),
        ),
        compiler_params=pltpu.CompilerParams(
            dimension_semantics=("parallel",)),
        cost_estimate=cost,
    )(embed, w_pad, b_pad)

    return out_padded[:B, :NUM_CLASSES].astype(jnp.float32)


def init_params(key):
    """Deterministic init mimicking torch.nn.Linear defaults (U(+/- 1/sqrt(fan_in))).

    Returned weights are in (in_features, out_features) layout (transposed vs torch).
    """
    k1, k2, k3, k4 = jax.random.split(key, 4)
    bound = 1.0 / jnp.sqrt(float(HIDDEN))
    w1 = jax.random.uniform(k1, (HIDDEN, HIDDEN), jnp.float32, -bound, bound)
    b1 = jax.random.uniform(k2, (HIDDEN,), jnp.float32, -bound, bound)
    w2 = jax.random.uniform(k3, (HIDDEN, NUM_CLASSES), jnp.float32, -bound, bound)
    b2 = jax.random.uniform(k4, (NUM_CLASSES,), jnp.float32, -bound, bound)
    return w1, b1, w2, b2


if __name__ == "__main__":
    key = jax.random.PRNGKey(0)
    k_x, k_p = jax.random.split(key)

    w1, b1, w2, b2 = init_params(k_p)

    def ref_forward(x):
        # Pure-JAX reference of the PyTorch forward: fc2(fc1(embed)).
        return (x @ w1 + b1) @ w2 + b2

    # Fold once at "parameter-load time" (hoisted out of the forward path).
    wp_f32, bp_f32 = fold_scorer_params(w1, b1, w2, b2, use_bf16=False)
    wp_bf16, bp_bf16 = fold_scorer_params(w1, b1, w2, b2, use_bf16=True)
    jax.block_until_ready((wp_f32, bp_f32, wp_bf16, bp_bf16))

    # 1) Small batch, f32 path, tight tolerance (single exact tile).
    x8 = jax.random.normal(k_x, (8, HIDDEN), jnp.float32)
    out8 = jax.block_until_ready(scorer_forward(x8, wp_f32, bp_f32))
    assert out8.shape == (8, NUM_CLASSES)
    assert jnp.allclose(out8, ref_forward(x8), atol=2e-4, rtol=2e-4)

    # 2) Batch not a multiple of the tile (partial last block, 2 grid steps), bf16 path.
    x200 = jax.random.normal(jax.random.PRNGKey(1), (200, HIDDEN), jnp.float32)
    out200 = jax.block_until_ready(scorer_forward(x200, wp_bf16, bp_bf16))
    assert out200.shape == (200, NUM_CLASSES)
    assert jnp.allclose(out200, ref_forward(x200), atol=3e-2, rtol=3e-2)

    # 3) Larger batch: exactly 2 grid steps (megacore sharding on v7x), bf16 path.
    x512 = jax.random.normal(jax.random.PRNGKey(2), (512, HIDDEN), jnp.float32)
    out512 = jax.block_until_ready(scorer_forward(x512, wp_bf16, bp_bf16))
    assert out512.shape == (512, NUM_CLASSES)
    assert jnp.allclose(out512, ref_forward(x512), atol=3e-2, rtol=3e-2)

    print("KERNEL_OK")
</pallas_src>

<mosaic_0001>
module attributes {stable_mosaic.version = 11 : i64} {
  func.func @scorer_kernel(%arg0: i32, %arg1: memref<8x768xf32, #tpu.memory_space<vmem>>, %arg2: memref<768x128xf32, #tpu.memory_space<vmem>>, %arg3: memref<1x128xf32, #tpu.memory_space<vmem>>, %arg4: memref<8x128xf32, #tpu.memory_space<vmem>>) attributes {dimension_semantics = [#tpu.dimension_semantics<parallel>], iteration_bounds = array<i64: 1>, scalar_prefetch = 0 : i64, scratch_operands = 0 : i64, tpu.core_type = #tpu.core_type<tc>, window_params = [{transform_indices = @transform_0, window_bounds = array<i64: 8, 768>}, {pipeline_mode = #tpu.pipeline_mode<synchronous>, transform_indices = @transform_1, window_bounds = array<i64: 768, 128>}, {pipeline_mode = #tpu.pipeline_mode<synchronous>, transform_indices = @transform_2, window_bounds = array<i64: 1, 128>}, {transform_indices = @transform_3, window_bounds = array<i64: 8, 128>}]} {
    %c0 = arith.constant 0 : index
    %c0_0 = arith.constant 0 : index
    %0 = vector.load %arg1[%c0, %c0_0] : memref<8x768xf32, #tpu.memory_space<vmem>>, vector<8x768xf32>
    %c0_1 = arith.constant 0 : index
    %c0_2 = arith.constant 0 : index
    %1 = vector.load %arg2[%c0_1, %c0_2] : memref<768x128xf32, #tpu.memory_space<vmem>>, vector<768x128xf32>
    %cst = arith.constant dense<0.000000e+00> : vector<8x128xf32>
    %2 = tpu.matmul %0, %1, %cst {dimension_numbers = #tpu.dot_dimension_numbers<[1], [0], [0], [1], [0, 0, 1, 1], [], []>} : vector<8x768xf32>, vector<768x128xf32>, vector<8x128xf32> -> vector<8x128xf32>
    %c0_3 = arith.constant 0 : index
    %c0_4 = arith.constant 0 : index
    %3 = vector.load %arg3[%c0_3, %c0_4] : memref<1x128xf32, #tpu.memory_space<vmem>>, vector<1x128xf32>
    %4 = vector.broadcast %3 : vector<1x128xf32> to vector<8x128xf32>
    %5 = arith.addf %2, %4 : vector<8x128xf32>
    %c0_5 = arith.constant 0 : index
    %c0_6 = arith.constant 0 : index
    %6 = vector.load %arg4[%c0_5, %c0_6] : memref<8x128xf32, #tpu.memory_space<vmem>>, vector<8x128xf32>
    tpu.vector_store %arg4[%c0_5, %c0_6], %5 {strides = array<i32>} : memref<8x128xf32, #tpu.memory_space<vmem>>, vector<8x128xf32>,
    return
  }
  func.func @transform_0(%arg0: i32) -> (i32, i32) {
    %c0_i32 = arith.constant 0 : i32
    %c0_i32_0 = arith.constant 0 : i32
    return %arg0, %c0_i32 : i32, i32
  }
  func.func @transform_1(%arg0: i32) -> (i32, i32) {
    %c0_i32 = arith.constant 0 : i32
    %c0_i32_0 = arith.constant 0 : i32
    %c0_i32_1 = arith.constant 0 : i32
    return %c0_i32, %c0_i32_0 : i32, i32
  }
  func.func @transform_2(%arg0: i32) -> (i32, i32) {
    %c0_i32 = arith.constant 0 : i32
    %c0_i32_0 = arith.constant 0 : i32
    %c0_i32_1 = arith.constant 0 : i32
    return %c0_i32, %c0_i32_0 : i32, i32
  }
  func.func @transform_3(%arg0: i32) -> (i32, i32) {
    %c0_i32 = arith.constant 0 : i32
    %c0_i32_0 = arith.constant 0 : i32
    return %arg0, %c0_i32 : i32, i32
  }
}

</mosaic_0001>

<llo_original>
// kernel: scorer_forward.1
$region0: #{scorer_forward.1}
  #allocation0 [shape = 'u32[]', space=smem, size = 0x4, offset = 0x4, fixed_abs, tag = 'smem constant byte address 0x4 - core index']
  #allocation1 [shape = 'u32[144,128]{1,0:T(1,128)}', space=vmem, size = 0x12000, scoped, tag = 'internal scratch']
  %s0 = inlined_call_operand.hbm [shape: f32[8,768], index: 0, kind: input, shape index: {}]
  %s1 = inlined_call_operand.hbm [shape: f32[768,128], index: 1, kind: input, shape index: {}]
  %s2 = inlined_call_operand.vmem [shape: f32[1,128], index: 2, kind: input, shape index: {}]
  %s3 = inlined_call_operand.vmem [shape: f32[8,128], index: 3, kind: output, shape index: {}]
  %s4 = sld [smem:[#allocation0]]
  $region30: #{scorer_forward.1} parent=0
    _
  %s6 = ssub.s32 1, %s4
  %s7 = scalar_select 0, %s6, %s4
  $region1: #{scorer_forward.1} parent=0
    #allocation2 [shape = 'u8[24576]{0}', space=vmem, size = 0x6000, scoped, tag = 'input window, operand 0, single buffered']
    #allocation3 [shape = 's32[1]{0}', space=sflag, size = 0x4, scoped, tag = 'scoped memory for scorer_forward.1']
    #allocation4 [shape = 'u8[393216]{0}', space=vmem, size = 0x60000, scoped, tag = 'input window, operand 1, single buffered']
    #allocation5 [shape = 's32[1]{0}', space=sflag, size = 0x4, scoped, tag = 'scoped memory for scorer_forward.1']
    %8 = vsyncpa [#allocation3], 0
    %9 = vsyncpa [#allocation5], 0
    // Predicated region
    $region2: #{scorer_forward.1} parent=1 // pred_check
      _
    $region3: #{scorer_forward.1} parent=1 // pred_check_branch
      %11 = sbr.rel (0) target = $region5
    $region4: #{scorer_forward.1} parent=1 // pred_region
      %s13 = ssub.s32 768, 768
      %14 = vsyncadd [#allocation3], %s13
      %s16 = sshll.u32 [#allocation2], 4
      %s17 = int_to_ptr.vmem [resolvable:$true] %s16
      %19 = dma.hbm_to_vmem [thread:$0]  %s0, 768, %s17, [#allocation3]
    $region5: #{scorer_forward.1} parent=1 // pred_fallthru
      _
    // Predicated region
    $region6: #{scorer_forward.1} parent=1 // pred_check
      _
    $region7: #{scorer_forward.1} parent=1 // pred_check_branch
      %21 = sbr.rel (0) target = $region9
    $region8: #{scorer_forward.1} parent=1 // pred_region
      %s23 = ssub.s32 12288, 12288
      %24 = vsyncadd [#allocation5], %s23
      %s25 = sshll.u32 [#allocation4], 4
      %s26 = int_to_ptr.vmem [resolvable:$true] %s25
      %31 = dma.hbm_to_vmem [thread:$0]  %s1, 12288, %s26, [#allocation5], 128, 128, 8
    $region9: #{scorer_forward.1} parent=1 // pred_fallthru
      _
    // Predicated region
    $region10: #{scorer_forward.1} parent=1 // pred_check
      _
    $region11: #{scorer_forward.1} parent=1 // pred_check_branch
      %33 = sbr.rel (0) target = $region13
    $region12: #{scorer_forward.1} parent=1 // pred_region
      _
    $region13: #{scorer_forward.1} parent=1 // pred_fallthru
      _
    // Predicated region
    $region14: #{scorer_forward.1} parent=1 // pred_check
      _
    $region15: #{scorer_forward.1} parent=1 // pred_check_branch
      %35 = sbr.rel (0) target = $region17
    $region16: #{scorer_forward.1} parent=1 // pred_region
      %36 = dma.done [#allocation3], 768
    $region17: #{scorer_forward.1} parent=1 // pred_fallthru
      _
    // Predicated region
    $region18: #{scorer_forward.1} parent=1 // pred_check
      _
    $region19: #{scorer_forward.1} parent=1 // pred_check_branch
      %38 = sbr.rel (0) target = $region21
    $region20: #{scorer_forward.1} parent=1 // pred_region
      %39 = dma.done [#allocation5], 12288
    $region21: #{scorer_forward.1} parent=1 // pred_fallthru
      _
    %v40 = vld [vmem:[#allocation2] sm:$0xff]
    %v41 = vld [vmem:[#allocation2 + $0x8] sm:$0xff]
    %v42 = vld [vmem:[#allocation2 + $0x10] sm:$0xff]
    %v43 = vld [vmem:[#allocation2 + $0x18] sm:$0xff]
    %v44 = vld [vmem:[#allocation2 + $0x20] sm:$0xff]
    %v45 = vld [vmem:[#allocation2 + $0x28] sm:$0xff]
    %v46 = vld [vmem:[#allocation4] sm:$0xff]
    %v47 = vld [vmem:[#allocation4 + $0x8] sm:$0xff]
    %v48 = vld [vmem:[#allocation4 + $0x10] sm:$0xff]
    %v49 = vld [vmem:[#allocation4 + $0x18] sm:$0xff]
    %v50 = vld [vmem:[#allocation4 + $0x20] sm:$0xff]
    %v51 = vld [vmem:[#allocation4 + $0x28] sm:$0xff]
    %v52 = vld [vmem:[#allocation4 + $0x30] sm:$0xff]
    %v53 = vld [vmem:[#allocation4 + $0x38] sm:$0xff]
    %v54 = vld [vmem:[#allocation4 + $0x40] sm:$0xff]
    %v55 = vld [vmem:[#allocation4 + $0x48] sm:$0xff]
    %v56 = vld [vmem:[#allocation4 + $0x50] sm:$0xff]
    %v57 = vld [vmem:[#allocation4 + $0x58] sm:$0xff]
    %v58 = vld [vmem:[#allocation4 + $0x60] sm:$0xff]
    %v59 = vld [vmem:[#allocation4 + $0x68] sm:$0xff]
    %v60 = vld [vmem:[#allocation4 + $0x70] sm:$0xff]
    %v61 = vld [vmem:[#allocation4 + $0x78] sm:$0xff]
    %v62 = vld [vmem:[#allocation4 + $0x80] sm:$0xff]
    %v63 = vld [vmem:[#allocation4 + $0x88] sm:$0xff]
    %v64 = vld [vmem:[#allocation4 + $0x90] sm:$0xff]
    %v65 = vld [vmem:[#allocation4 + $0x98] sm:$0xff]
    %v66 = vld [vmem:[#allocation4 + $0xa0] sm:$0xff]
    %v67 = vld [vmem:[#allocation4 + $0xa8] sm:$0xff]
    %v68 = vld [vmem:[#allocation4 + $0xb0] sm:$0xff]
    %v69 = vld [vmem:[#allocation4 + $0xb8] sm:$0xff]
    %v70 = vld [vmem:[#allocation4 + $0xc0] sm:$0xff]
    %v71 = vld [vmem:[#allocation4 + $0xc8] sm:$0xff]
    %v72 = vld [vmem:[#allocation4 + $0xd0] sm:$0xff]
    %v73 = vld [vmem:[#allocation4 + $0xd8] sm:$0xff]
    %v74 = vld [vmem:[#allocation4 + $0xe0] sm:$0xff]
    %v75 = vld [vmem:[#allocation4 + $0xe8] sm:$0xff]
    %v76 = vld [vmem:[#allocation4 + $0xf0] sm:$0xff]
    %v77 = vld [vmem:[#allocation4 + $0xf8] sm:$0xff]
    %v78 = vld [vmem:[#allocation4 + $0x100] sm:$0xff]
    %v79 = vld [vmem:[#allocation4 + $0x108] sm:$0xff]
    %v80 = vld [vmem:[#allocation4 + $0x110] sm:$0xff]
    %v81 = vld [vmem:[#allocation4 + $0x118] sm:$0xff]
    %v82 = vld [vmem:[#allocation4 + $0x120] sm:$0xff]
    %v83 = vld [vmem:[#allocation4 + $0x128] sm:$0xff]
    %v84 = vld [vmem:[#allocation4 + $0x130] sm:$0xff]
    %v85 = vld [vmem:[#allocation4 + $0x138] sm:$0xff]
    %v86 = vld [vmem:[#allocation4 + $0x140] sm:$0xff]
    %v87 = vld [vmem:[#allocation4 + $0x148] sm:$0xff]
    %v88 = vld [vmem:[#allocation4 + $0x150] sm:$0xff]
    %v89 = vld [vmem:[#allocation4 + $0x158] sm:$0xff]
    %v90 = vld [vmem:[#allocation4 + $0x160] sm:$0xff]
    %v91 = vld [vmem:[#allocation4 + $0x168] sm:$0xff]
    %v92 = vld [vmem:[#allocation4 + $0x170] sm:$0xff]
    %v93 = vld [vmem:[#allocation4 + $0x178] sm:$0xff]
    %v94 = vld [vmem:[#allocation4 + $0x180] sm:$0xff]
    %v95 = vld [vmem:[#allocation4 + $0x188] sm:$0xff]
    %v96 = vld [vmem:[#allocation4 + $0x190] sm:$0xff]
    %v97 = vld [vmem:[#allocation4 + $0x198] sm:$0xff]
    %v98 = vld [vmem:[#allocation4 + $0x1a0] sm:$0xff]
    %v99 = vld [vmem:[#allocation4 + $0x1a8] sm:$0xff]
    %v100 = vld [vmem:[#allocation4 + $0x1b0] sm:$0xff]
    %v101 = vld [vmem:[#allocation4 + $0x1b8] sm:$0xff]
    %v102 = vld [vmem:[#allocation4 + $0x1c0] sm:$0xff]
    %v103 = vld [vmem:[#allocation4 + $0x1c8] sm:$0xff]
    %v104 = vld [vmem:[#allocation4 + $0x1d0] sm:$0xff]
    %v105 = vld [vmem:[#allocation4 + $0x1d8] sm:$0xff]
    %v106 = vld [vmem:[#allocation4 + $0x1e0] sm:$0xff]
    %v107 = vld [vmem:[#allocation4 + $0x1e8] sm:$0xff]
    %v108 = vld [vmem:[#allocation4 + $0x1f0] sm:$0xff]
    %v109 = vld [vmem:[#allocation4 + $0x1f8] sm:$0xff]
    %v110 = vld [vmem:[#allocation4 + $0x200] sm:$0xff]
    %v111 = vld [vmem:[#allocation4 + $0x208] sm:$0xff]
    %v112 = vld [vmem:[#allocation4 + $0x210] sm:$0xff]
    %v113 = vld [vmem:[#allocation4 + $0x218] sm:$0xff]
    %v114 = vld [vmem:[#allocation4 + $0x220] sm:$0xff]
    %v115 = vld [vmem:[#allocation4 + $0x228] sm:$0xff]
    %v116 = vld [vmem:[#allocation4 + $0x230] sm:$0xff]
    %v117 = vld [vmem:[#allocation4 + $0x238] sm:$0xff]
    %v118 = vld [vmem:[#allocation4 + $0x240] sm:$0xff]
    %v119 = vld [vmem:[#allocation4 + $0x248] sm:$0xff]
    %v120 = vld [vmem:[#allocation4 + $0x250] sm:$0xff]
    %v121 = vld [vmem:[#allocation4 + $0x258] sm:$0xff]
    %v122 = vld [vmem:[#allocation4 + $0x260] sm:$0xff]
    %v123 = vld [vmem:[#allocation4 + $0x268] sm:$0xff]
    %v124 = vld [vmem:[#allocation4 + $0x270] sm:$0xff]
    %v125 = vld [vmem:[#allocation4 + $0x278] sm:$0xff]
    %v126 = vld [vmem:[#allocation4 + $0x280] sm:$0xff]
    %v127 = vld [vmem:[#allocation4 + $0x288] sm:$0xff]
    %v128 = vld [vmem:[#allocation4 + $0x290] sm:$0xff]
    %v129 = vld [vmem:[#allocation4 + $0x298] sm:$0xff]
    %v130 = vld [vmem:[#allocation4 + $0x2a0] sm:$0xff]
    %v131 = vld [vmem:[#allocation4 + $0x2a8] sm:$0xff]
    %v132 = vld [vmem:[#allocation4 + $0x2b0] sm:$0xff]
    %v133 = vld [vmem:[#allocation4 + $0x2b8] sm:$0xff]
    %v134 = vld [vmem:[#allocation4 + $0x2c0] sm:$0xff]
    %v135 = vld [vmem:[#allocation4 + $0x2c8] sm:$0xff]
    %v136 = vld [vmem:[#allocation4 + $0x2d0] sm:$0xff]
    %v137 = vld [vmem:[#allocation4 + $0x2d8] sm:$0xff]
    %v138 = vld [vmem:[#allocation4 + $0x2e0] sm:$0xff]
    %v139 = vld [vmem:[#allocation4 + $0x2e8] sm:$0xff]
    %v140 = vld [vmem:[#allocation4 + $0x2f0] sm:$0xff]
    %v141 = vld [vmem:[#allocation4 + $0x2f8] sm:$0xff]
    %v142 = vld [vmem:[%s2] sm:$0x1]
    %v144 = vlaneseq
    %v145 = vshrl.u32 %v144, 7
    %v146 = vsub.s32 0, %v145
    %v147 = vrot.slane %v142, %v146
    %149 = vmatprep.subr.mxu0 0.0
    %150 = vmatpush1.msra.mxu0 %v46
    %151 = vmatprep.subr.mxu0 0.0
    %152 = vmatpush1.msra.mxu0 %v47
    %153 = vmatprep.subr.mxu0 0.0
    %154 = vmatpush1.msra.mxu0 %v48
    %155 = vmatprep.subr.mxu0 0.0
    %156 = vmatpush1.msra.mxu0 %v49
    %157 = vmatprep.subr.mxu0 0.0
    %158 = vmatpush1.msra.mxu0 %v50
    %159 = vmatprep.subr.mxu0 0.0
    %160 = vmatpush1.msra.mxu0 %v51
    %161 = vmatprep.subr.mxu0 0.0
    %162 = vmatpush1.msra.mxu0 %v52
    %163 = vmatprep.subr.mxu0 0.0
    %164 = vmatpush1.msra.mxu0 %v53
    %165 = vmatprep.subr.mxu0 0.0
    %166 = vmatpush1.msra.mxu0 %v54
    %167 = vmatprep.subr.mxu0 0.0
    %168 = vmatpush1.msra.mxu0 %v55
    %169 = vmatprep.subr.mxu0 0.0
    %170 = vmatpush1.msra.mxu0 %v56
    %171 = vmatprep.subr.mxu0 0.0
    %172 = vmatpush1.msra.mxu0 %v57
    %173 = vmatprep.subr.mxu0 0.0
    %174 = vmatpush1.msra.mxu0 %v58
    %175 = vmatprep.subr.mxu0 0.0
    %176 = vmatpush1.msra.mxu0 %v59
    %177 = vmatprep.subr.mxu0 0.0
    %178 = vmatpush1.msra.mxu0 %v60
    %179 = vmatprep.subr.mxu0 0.0
    %180 = vmatpush1.msra.mxu0 %v61
    %181 = vmatprep.subr.mxu0 0.0
    %182 = vmatpush1.msra.mxu0 %v62
    %183 = vmatprep.subr.mxu0 0.0
    %184 = vmatpush1.msra.mxu0 %v63
    %185 = vmatprep.subr.mxu0 0.0
    %186 = vmatpush1.msra.mxu0 %v64
    %187 = vmatprep.subr.mxu0 0.0
    %188 = vmatpush1.msra.mxu0 %v65
    %189 = vmatprep.subr.mxu0 0.0
    %190 = vmatpush1.msra.mxu0 %v66
    %191 = vmatprep.subr.mxu0 0.0
    %192 = vmatpush1.msra.mxu0 %v67
    %193 = vmatprep.subr.mxu0 0.0
    %194 = vmatpush1.msra.mxu0 %v68
    %195 = vmatprep.subr.mxu0 0.0
    %196 = vmatpush1.msra.mxu0 %v69
    %197 = vmatprep.subr.mxu0 0.0
    %198 = vmatpush1.msra.mxu0 %v70
    %199 = vmatprep.subr.mxu0 0.0
    %200 = vmatpush1.msra.mxu0 %v71
    %201 = vmatprep.subr.mxu0 0.0
    %202 = vmatpush1.msra.mxu0 %v72
    %203 = vmatprep.subr.mxu0 0.0
    %204 = vmatpush1.msra.mxu0 %v73
    %205 = vmatprep.subr.mxu0 0.0
    %206 = vmatpush1.msra.mxu0 %v74
    %207 = vmatprep.subr.mxu0 0.0
    %208 = vmatpush1.msra.mxu0 %v75
    %209 = vmatprep.subr.mxu0 0.0
    %210 = vmatpush1.msra.mxu0 %v76
    %211 = vmatprep.subr.mxu0 0.0
    %212 = vmatpush1.msra.mxu0 %v77
    %213 = vmatprep.mubr.f32.mxu0 %v41
    %214 = vmatmul.mubr.f32.gmra.mrb[0].mxu0 %v40
    %v215 = vpop.f32.mrb[0].mxu0
    %v216 = vadd.f32 %v147, %v215
    %v217 = vpop.f32.mrb[0].mxu0
    %218 = vdwg.mxu0
    %219 = vmatprep.subr.mxu0 0.0
    %220 = vmatpush1.msra.mxu0 %v78
    %221 = vmatprep.subr.mxu0 0.0
    %222 = vmatpush1.msra.mxu0 %v79
    %223 = vmatprep.subr.mxu0 0.0
    %224 = vmatpush1.msra.mxu0 %v80
    %225 = vmatprep.subr.mxu0 0.0
    %226 = vmatpush1.msra.mxu0 %v81
    %227 = vmatprep.subr.mxu0 0.0
    %228 = vmatpush1.msra.mxu0 %v82
    %229 = vmatprep.subr.mxu0 0.0
    %230 = vmatpush1.msra.mxu0 %v83
    %231 = vmatprep.subr.mxu0 0.0
    %232 = vmatpush1.msra.mxu0 %v84
    %233 = vmatprep.subr.mxu0 0.0
    %234 = vmatpush1.msra.mxu0 %v85
    %235 = vmatprep.subr.mxu0 0.0
    %236 = vmatpush1.msra.mxu0 %v86
    %237 = vmatprep.subr.mxu0 0.0
    %238 = vmatpush1.msra.mxu0 %v87
    %239 = vmatprep.subr.mxu0 0.0
    %240 = vmatpush1.msra.mxu0 %v88
    %241 = vmatprep.subr.mxu0 0.0
    %242 = vmatpush1.msra.mxu0 %v89
    %243 = vmatprep.subr.mxu0 0.0
    %244 = vmatpush1.msra.mxu0 %v90
    %245 = vmatprep.subr.mxu0 0.0
    %246 = vmatpush1.msra.mxu0 %v91
    %247 = vmatprep.subr.mxu0 0.0
    %248 = vmatpush1.msra.mxu0 %v92
    %249 = vmatprep.subr.mxu0 0.0
    %250 = vmatpush1.msra.mxu0 %v93
    %251 = vmatprep.subr.mxu0 0.0
    %252 = vmatpush1.msra.mxu0 %v94
    %253 = vmatprep.subr.mxu0 0.0
    %254 = vmatpush1.msra.mxu0 %v95
    %255 = vmatprep.subr.mxu0 0.0
    %256 = vmatpush1.msra.mxu0 %v96
    %257 = vmatprep.subr.mxu0 0.0
    %258 = vmatpush1.msra.mxu0 %v97
    %259 = vmatprep.subr.mxu0 0.0
    %260 = vmatpush1.msra.mxu0 %v98
    %261 = vmatprep.subr.mxu0 0.0
    %262 = vmatpush1.msra.mxu0 %v99
    %263 = vmatprep.subr.mxu0 0.0
    %264 = vmatpush1.msra.mxu0 %v100
    %265 = vmatprep.subr.mxu0 0.0
    %266 = vmatpush1.msra.mxu0 %v101
    %267 = vmatprep.subr.mxu0 0.0
    %268 = vmatpush1.msra.mxu0 %v102
    %269 = vmatprep.subr.mxu0 0.0
    %270 = vmatpush1.msra.mxu0 %v103
    %271 = vmatprep.subr.mxu0 0.0
    %272 = vmatpush1.msra.mxu0 %v104
    %273 = vmatprep.subr.mxu0 0.0
    %274 = vmatpush1.msra.mxu0 %v105
    %275 = vmatprep.subr.mxu0 0.0
    %276 = vmatpush1.msra.mxu0 %v106
    %277 = vmatprep.subr.mxu0 0.0
    %278 = vmatpush1.msra.mxu0 %v107
    %279 = vmatprep.subr.mxu0 0.0
    %280 = vmatpush1.msra.mxu0 %v108
    %281 = vmatprep.subr.mxu0 0.0
    %282 = vmatpush1.msra.mxu0 %v109
    %283 = vmatprep.mubr.f32.mxu0 %v43
    %284 = vmatmul.mubr.f32.gmra.mrb[0].mxu0 %v42
    %v285 = vpop.f32.mrb[0].mxu0
    %v286 = vadd.f32 %v216, %v285
    %v287 = vpop.f32.mrb[0].mxu0
    %288 = vdwg.mxu0
    %289 = vmatprep.subr.mxu0 0.0
    %290 = vmatpush1.msra.mxu0 %v110
    %291 = vmatprep.subr.mxu0 0.0
    %292 = vmatpush1.msra.mxu0 %v111
    %293 = vmatprep.subr.mxu0 0.0
    %294 = vmatpush1.msra.mxu0 %v112
    %295 = vmatprep.subr.mxu0 0.0
    %296 = vmatpush1.msra.mxu0 %v113
    %297 = vmatprep.subr.mxu0 0.0
    %298 = vmatpush1.msra.mxu0 %v114
    %299 = vmatprep.subr.mxu0 0.0
    %300 = vmatpush1.msra.mxu0 %v115
    %301 = vmatprep.subr.mxu0 0.0
    %302 = vmatpush1.msra.mxu0 %v116
    %303 = vmatprep.subr.mxu0 0.0
    %304 = vmatpush1.msra.mxu0 %v117
    %305 = vmatprep.subr.mxu0 0.0
    %306 = vmatpush1.msra.mxu0 %v118
    %307 = vmatprep.subr.mxu0 0.0
    %308 = vmatpush1.msra.mxu0 %v119
    %309 = vmatprep.subr.mxu0 0.0
    %310 = vmatpush1.msra.mxu0 %v120
    %311 = vmatprep.subr.mxu0 0.0
    %312 = vmatpush1.msra.mxu0 %v121
    %313 = vmatprep.subr.mxu0 0.0
    %314 = vmatpush1.msra.mxu0 %v122
    %315 = vmatprep.subr.mxu0 0.0
    %316 = vmatpush1.msra.mxu0 %v123
    %317 = vmatprep.subr.mxu0 0.0
    %318 = vmatpush1.msra.mxu0 %v124
    %319 = vmatprep.subr.mxu0 0.0
    %320 = vmatpush1.msra.mxu0 %v125
    %321 = vmatprep.subr.mxu0 0.0
    %322 = vmatpush1.msra.mxu0 %v126
    %323 = vmatprep.subr.mxu0 0.0
    %324 = vmatpush1.msra.mxu0 %v127
    %325 = vmatprep.subr.mxu0 0.0
    %326 = vmatpush1.msra.mxu0 %v128
    %327 = vmatprep.subr.mxu0 0.0
    %328 = vmatpush1.msra.mxu0 %v129
    %329 = vmatprep.subr.mxu0 0.0
    %330 = vmatpush1.msra.mxu0 %v130
    %331 = vmatprep.subr.mxu0 0.0
    %332 = vmatpush1.msra.mxu0 %v131
    %333 = vmatprep.subr.mxu0 0.0
    %334 = vmatpush1.msra.mxu0 %v132
    %335 = vmatprep.subr.mxu0 0.0
    %336 = vmatpush1.msra.mxu0 %v133
    %337 = vmatprep.subr.mxu0 0.0
    %338 = vmatpush1.msra.mxu0 %v134
    %339 = vmatprep.subr.mxu0 0.0
    %340 = vmatpush1.msra.mxu0 %v135
    %341 = vmatprep.subr.mxu0 0.0
    %342 = vmatpush1.msra.mxu0 %v136
    %343 = vmatprep.subr.mxu0 0.0
    %344 = vmatpush1.msra.mxu0 %v137
    %345 = vmatprep.subr.mxu0 0.0
    %346 = vmatpush1.msra.mxu0 %v138
    %347 = vmatprep.subr.mxu0 0.0
    %348 = vmatpush1.msra.mxu0 %v139
    %349 = vmatprep.subr.mxu0 0.0
    %350 = vmatpush1.msra.mxu0 %v140
    %351 = vmatprep.subr.mxu0 0.0
    %352 = vmatpush1.msra.mxu0 %v141
    %353 = vmatprep.mubr.f32.mxu0 %v45
    %354 = vmatmul.mubr.f32.gmra.mrb[0].mxu0 %v44
    %v355 = vpop.f32.mrb[0].mxu0
    %v356 = vadd.f32 %v286, %v355
    %v357 = vpop.f32.mrb[0].mxu0
    %358 = vdwg.mxu0
    %359 = vst [vmem:[%s3] sm:$0xff] %v356
    // Predicated region
    $region22: #{scorer_forward.1} parent=1 // pred_check
      _
    $region23: #{scorer_forward.1} parent=1 // pred_check_branch
      %361 = sbr.rel (0) target = $region25
    $region24: #{scorer_forward.1} parent=1 // pred_region
      _
    $region25: #{scorer_forward.1} parent=1 // pred_fallthru
      _
    // Predicated region
    $region26: #{scorer_forward.1} parent=1 // pred_check
      _
    $region27: #{scorer_forward.1} parent=1 // pred_check_branch
      %363 = sbr.rel (0) target = $region29
    $region28: #{scorer_forward.1} parent=1 // pred_region
      _
    $region29: #{scorer_forward.1} parent=1 // pred_fallthru
      _
    %364 = vsyncpa [#allocation3], 1
    %365 = vsyncpa [#allocation5], 1

</llo_original>
